<compile_context>
chip_gen: v7x
topology: tpu7x:2x2x1
jax: 0.10.0
libtpu: 0.0.40
codegen_flags: <defaults>
</compile_context>

<pallas_src>
import math
from functools import partial

import jax
import jax.numpy as jnp
from jax.experimental import pallas as pl
from jax.experimental.pallas import tpu as pltpu


_VMEM_LIMIT = 48 * 1024 * 1024  # explicit scoped-VMEM budget (fits v5e/v6e/v7x)


# ----------------------------------------------------------------------------
# Kernel 1: tiled linear projection  y = x @ W + b
# ----------------------------------------------------------------------------
def _linear_kernel(x_ref, w_ref, b_ref, o_ref):
    # x: (TM, Din)  w: (Din, TN)  b: (1, TN)  o: (TM, TN)
    acc = jnp.dot(x_ref[...], w_ref[...], preferred_element_type=jnp.float32)
    acc = acc + b_ref[...].astype(jnp.float32)
    o_ref[...] = acc.astype(o_ref.dtype)


def linear_proj(x2d, w, b, *, tm=256, tn=512):
    """x2d: (N, Din), w: (Din, Dout), b: (Dout,) -> (N, Dout)."""
    N, Din = x2d.shape
    Dout = w.shape[1]
    tm = min(tm, N)
    tn = min(tn, Dout)
    grid = (pl.cdiv(N, tm), pl.cdiv(Dout, tn))
    return pl.pallas_call(
        _linear_kernel,
        out_shape=jax.ShapeDtypeStruct((N, Dout), x2d.dtype),
        grid=grid,
        in_specs=[
            pl.BlockSpec((tm, Din), lambda i, j: (i, 0)),
            pl.BlockSpec((Din, tn), lambda i, j: (0, j)),
            pl.BlockSpec((1, tn), lambda i, j: (0, j)),
        ],
        out_specs=pl.BlockSpec((tm, tn), lambda i, j: (i, j)),
        compiler_params=pltpu.CompilerParams(
            dimension_semantics=("parallel", "parallel"),
            vmem_limit_bytes=_VMEM_LIMIT,
        ),
    )(x2d, w, b.reshape(1, Dout))


# ----------------------------------------------------------------------------
# Kernel 2: scaled dot-product attention over G grouped (head*batch) slices
# ----------------------------------------------------------------------------
def _mha_attn_kernel(q_ref, k_ref, v_ref, ctx_ref, attn_ref, *, scale):
    q = q_ref[...]                       # (G, TQ, Dh)  -- native dtype
    k = k_ref[...]                       # (G, Sk, Dh)
    v = v_ref[...]                       # (G, Sk, Dh)

    # Fold 1/sqrt(d_head) into q (Sq*Dh elems instead of Sq*Sk score elems).
    qs = q * scale

    # score[g,q,k] = sum_d qs[g,q,d] * k[g,k,d]  (no explicit k transpose)
    s = jax.lax.dot_general(
        qs, k,
        dimension_numbers=(((2,), (2,)), ((0,), (0,))),
        preferred_element_type=jnp.float32,
    )                                    # (G, TQ, Sk) f32

    # Numerically-stable softmax over the key axis (f32).
    m = jnp.max(s, axis=-1, keepdims=True)
    e = jnp.exp(s - m)
    denom = jnp.sum(e, axis=-1, keepdims=True)
    # exact reciprocal (approx=True would break 1e-5 parity with the reference)
    attn = e * pl.reciprocal(denom, approx=False)

    # context = attn @ V  (probabilities cast to the value dtype for the MXU)
    ctx = jax.lax.dot_general(
        attn.astype(v.dtype), v,
        dimension_numbers=(((2,), (1,)), ((0,), (0,))),
        preferred_element_type=jnp.float32,
    )                                    # (G, TQ, Dh)

    ctx_ref[...] = ctx.astype(ctx_ref.dtype)
    attn_ref[...] = attn.astype(attn_ref.dtype)


def _largest_divisor_leq(n, cap):
    cap = max(1, min(cap, n))
    for g in range(cap, 0, -1):
        if n % g == 0:
            return g
    return 1


def _pick_q_tile(sq, g, sk, target=512, budget_bytes=4 << 20):
    tq = min(target, sq)
    # Shrink (keeping 8-row alignment) if the f32 score tile would get large.
    while tq > 8 and g * tq * sk * 4 > budget_bytes:
        tq = max(8, (tq // 2 // 8) * 8 or 8)
    return tq


def scaled_dot_attention(qh, kh, vh):
    """qh/kh/vh: (H*B, S, Dh) -> (context (H*B, Sq, Dh), attn (H*B, Sq, Sk))."""
    BH, Sq, Dh = qh.shape
    Sk = kh.shape[1]
    scale = 1.0 / math.sqrt(Dh)

    # Group several (head*batch) slices per step so the batched matmul fills
    # lanes/vregs despite a small d_head and amortizes per-step overhead.
    G = _largest_divisor_leq(BH, max(1, 128 // max(Dh, 1)))
    TQ = _pick_q_tile(Sq, G, Sk)
    grid = (BH // G, pl.cdiv(Sq, TQ))

    return pl.pallas_call(
        partial(_mha_attn_kernel, scale=scale),
        out_shape=(
            jax.ShapeDtypeStruct((BH, Sq, Dh), qh.dtype),
            jax.ShapeDtypeStruct((BH, Sq, Sk), qh.dtype),
        ),
        grid=grid,
        in_specs=[
            pl.BlockSpec((G, TQ, Dh), lambda g, qi: (g, qi, 0)),
            pl.BlockSpec((G, Sk, Dh), lambda g, qi: (g, 0, 0)),
            pl.BlockSpec((G, Sk, Dh), lambda g, qi: (g, 0, 0)),
        ],
        out_specs=(
            pl.BlockSpec((G, TQ, Dh), lambda g, qi: (g, qi, 0)),
            pl.BlockSpec((G, TQ, Sk), lambda g, qi: (g, qi, 0)),
        ),
        compiler_params=pltpu.CompilerParams(
            dimension_semantics=("parallel", "parallel"),
            vmem_limit_bytes=_VMEM_LIMIT,
        ),
    )(qh, kh, vh)


# ----------------------------------------------------------------------------
# MultiHeadAttention forward (glue in plain JAX, compute in Pallas kernels)
# ----------------------------------------------------------------------------
def multi_head_attention(query, key, value, params, num_heads):
    """
    query : (B, q_len, d_model)   key : (B, k_len, d_model)   value : (B, v_len, d_model)
    Returns (context (B, q_len, d_model), attn (B*num_heads, q_len, k_len)),
    attn head-major ordered exactly like the PyTorch module.
    """
    wq, bq, wk, bk, wv, bv = params
    B, Sq, D = query.shape
    Sk = key.shape[1]
    Sv = value.shape[1]
    assert Sk == Sv, "attn @ V requires k_len == v_len"
    H = num_heads
    assert D % H == 0
    dh = D // H

    if (query is key) and (key is value):
        # Self-attention: one fused QKV projection (single pallas_call, the
        # activation is read from HBM once, MXU output width = 3*d_model).
        w_qkv = jnp.concatenate([wq, wk, wv], axis=1)      # (D, 3D)
        b_qkv = jnp.concatenate([bq, bk, bv], axis=0)      # (3D,)
        qkv = linear_proj(query.reshape(B * Sq, D), w_qkv, b_qkv)
        q2d, k2d, v2d = jnp.split(qkv, 3, axis=1)
        q = q2d.reshape(B, Sq, H, dh)
        k = k2d.reshape(B, Sk, H, dh)
        v = v2d.reshape(B, Sv, H, dh)
    else:
        # Cross-attention: three distinct inputs, three tiled projections.
        q = linear_proj(query.reshape(B * Sq, D), wq, bq).reshape(B, Sq, H, dh)
        k = linear_proj(key.reshape(B * Sk, D), wk, bk).reshape(B, Sk, H, dh)
        v = linear_proj(value.reshape(B * Sv, D), wv, bv).reshape(B, Sv, H, dh)

    # Head-major layout (H*B, S, dh) -- same ordering as torch's
    # permute(2,0,1,3).view(B*H, S, dh).  Kept on the host so the per-head
    # attention blocks stay (8,128)-tileable for any d_head.
    qh = jnp.transpose(q, (2, 0, 1, 3)).reshape(H * B, Sq, dh)
    kh = jnp.transpose(k, (2, 0, 1, 3)).reshape(H * B, Sk, dh)
    vh = jnp.transpose(v, (2, 0, 1, 3)).reshape(H * B, Sv, dh)

    ctx, attn = scaled_dot_attention(qh, kh, vh)

    # context.view(H, B, Sq, dh).permute(1,2,0,3).view(B, Sq, H*dh)
    context = ctx.reshape(H, B, Sq, dh)
    context = jnp.transpose(context, (1, 2, 0, 3)).reshape(B, Sq, H * dh)
    return context, attn


# ----------------------------------------------------------------------------
# Pure-JAX reference (mirrors the PyTorch forward) for verification
# ----------------------------------------------------------------------------
def reference(query, key, value, params, num_heads):
    wq, bq, wk, bk, wv, bv = params
    B, Sq, D = query.shape
    Sk = key.shape[1]
    H = num_heads
    dh = D // H

    def project(x, w, b):
        return (x @ w + b).reshape(B, x.shape[1], H, dh)

    q = jnp.transpose(project(query, wq, bq), (2, 0, 1, 3)).reshape(H * B, Sq, dh)
    k = jnp.transpose(project(key, wk, bk), (2, 0, 1, 3)).reshape(H * B, Sk, dh)
    v = jnp.transpose(project(value, wv, bv), (2, 0, 1, 3)).reshape(H * B, Sk, dh)

    score = jnp.einsum("bqd,bkd->bqk", q, k) / math.sqrt(dh)
    attn = jax.nn.softmax(score, axis=-1)
    ctx = jnp.einsum("bqk,bkd->bqd", attn, v)
    ctx = ctx.reshape(H, B, Sq, dh)
    ctx = jnp.transpose(ctx, (1, 2, 0, 3)).reshape(B, Sq, D)
    return ctx, attn


if __name__ == "__main__":
    # Small, module-consistent shapes: batch=2, seq=8, d_model=32, heads=4
    B, S, D, H = 2, 8, 32, 4

    key0 = jax.random.PRNGKey(0)
    k_q, k_k, k_v, k_w = jax.random.split(key0, 4)

    query = jax.random.normal(k_q, (B, S, D), dtype=jnp.float32)
    key_in = jax.random.normal(k_k, (B, S, D), dtype=jnp.float32)
    value = jax.random.normal(k_v, (B, S, D), dtype=jnp.float32)

    # Deterministic parameter init (Linear-like uniform in [-1/sqrt(D), 1/sqrt(D)])
    wkeys = jax.random.split(k_w, 6)
    bound = 1.0 / math.sqrt(D)
    wq = jax.random.uniform(wkeys[0], (D, D), jnp.float32, -bound, bound)
    bq = jax.random.uniform(wkeys[1], (D,), jnp.float32, -bound, bound)
    wk = jax.random.uniform(wkeys[2], (D, D), jnp.float32, -bound, bound)
    bk = jax.random.uniform(wkeys[3], (D,), jnp.float32, -bound, bound)
    wv = jax.random.uniform(wkeys[4], (D, D), jnp.float32, -bound, bound)
    bv = jax.random.uniform(wkeys[5], (D,), jnp.float32, -bound, bound)
    params = (wq, bq, wk, bk, wv, bv)

    # --- general (cross-attention style) path: three distinct inputs ---
    context, attn = multi_head_attention(query, key_in, value, params, H)
    context = jax.block_until_ready(context)
    attn = jax.block_until_ready(attn)
    ctx_ref, attn_ref = reference(query, key_in, value, params, H)

    assert context.shape == (B, S, D)
    assert attn.shape == (B * H, S, S)
    assert jnp.allclose(context, ctx_ref, atol=1e-5, rtol=1e-5)
    assert jnp.allclose(attn, attn_ref, atol=1e-5, rtol=1e-5)

    # --- self-attention path: exercises the fused-QKV projection kernel ---
    context_s, attn_s = multi_head_attention(query, query, query, params, H)
    context_s = jax.block_until_ready(context_s)
    attn_s = jax.block_until_ready(attn_s)
    ctx_ref_s, attn_ref_s = reference(query, query, query, params, H)

    assert jnp.allclose(context_s, ctx_ref_s, atol=1e-5, rtol=1e-5)
    assert jnp.allclose(attn_s, attn_ref_s, atol=1e-5, rtol=1e-5)

    print("KERNEL_OK")
</pallas_src>

<mosaic_0001>
module attributes {stable_mosaic.version = 11 : i64} {
  func.func @_linear_kernel(%arg0: i32, %arg1: i32, %arg2: memref<16x32xf32, #tpu.memory_space<vmem>>, %arg3: memref<32x32xf32, #tpu.memory_space<vmem>>, %arg4: memref<1x32xf32, #tpu.memory_space<vmem>>, %arg5: memref<16x32xf32, #tpu.memory_space<vmem>>) attributes {dimension_semantics = [#tpu.dimension_semantics<parallel>, #tpu.dimension_semantics<parallel>], iteration_bounds = array<i64: 1, 1>, scalar_prefetch = 0 : i64, scratch_operands = 0 : i64, tpu.core_type = #tpu.core_type<tc>, window_params = [{transform_indices = @transform_0, window_bounds = array<i64: 16, 32>}, {transform_indices = @transform_1, window_bounds = array<i64: 32, 32>}, {transform_indices = @transform_2, window_bounds = array<i64: 1, 32>}, {transform_indices = @transform_3, window_bounds = array<i64: 16, 32>}]} {
    %c0 = arith.constant 0 : index
    %c0_0 = arith.constant 0 : index
    %0 = vector.load %arg2[%c0, %c0_0] : memref<16x32xf32, #tpu.memory_space<vmem>>, vector<16x32xf32>
    %c0_1 = arith.constant 0 : index
    %c0_2 = arith.constant 0 : index
    %1 = vector.load %arg3[%c0_1, %c0_2] : memref<32x32xf32, #tpu.memory_space<vmem>>, vector<32x32xf32>
    %cst = arith.constant dense<0.000000e+00> : vector<16x32xf32>
    %2 = tpu.matmul %0, %1, %cst {dimension_numbers = #tpu.dot_dimension_numbers<[1], [0], [0], [1], [0, 0, 1, 1], [], []>} : vector<16x32xf32>, vector<32x32xf32>, vector<16x32xf32> -> vector<16x32xf32>
    %c0_3 = arith.constant 0 : index
    %c0_4 = arith.constant 0 : index
    %3 = vector.load %arg4[%c0_3, %c0_4] : memref<1x32xf32, #tpu.memory_space<vmem>>, vector<1x32xf32>
    %4 = vector.broadcast %3 : vector<1x32xf32> to vector<16x32xf32>
    %5 = arith.addf %2, %4 : vector<16x32xf32>
    %c0_5 = arith.constant 0 : index
    %c0_6 = arith.constant 0 : index
    %6 = vector.load %arg5[%c0_5, %c0_6] : memref<16x32xf32, #tpu.memory_space<vmem>>, vector<16x32xf32>
    tpu.vector_store %arg5[%c0_5, %c0_6], %5 {strides = array<i32>} : memref<16x32xf32, #tpu.memory_space<vmem>>, vector<16x32xf32>,
    return
  }
  func.func @transform_0(%arg0: i32, %arg1: i32) -> (i32, i32) {
    %c0_i32 = arith.constant 0 : i32
    %c0_i32_0 = arith.constant 0 : i32
    return %arg0, %c0_i32 : i32, i32
  }
  func.func @transform_1(%arg0: i32, %arg1: i32) -> (i32, i32) {
    %c0_i32 = arith.constant 0 : i32
    %c0_i32_0 = arith.constant 0 : i32
    return %c0_i32, %arg1 : i32, i32
  }
  func.func @transform_2(%arg0: i32, %arg1: i32) -> (i32, i32) {
    %c0_i32 = arith.constant 0 : i32
    %c0_i32_0 = arith.constant 0 : i32
    return %c0_i32, %arg1 : i32, i32
  }
  func.func @transform_3(%arg0: i32, %arg1: i32) -> (i32, i32) {
    %c0_i32 = arith.constant 0 : i32
    return %arg0, %arg1 : i32, i32
  }
}

</mosaic_0001>

<llo_original>
// kernel: tpu_custom_call.1
$region0: #{tpu_custom_call.1}
  #allocation0 [shape = 'u32[]', space=smem, size = 0x4, offset = 0x4, fixed_abs, tag = 'smem constant byte address 0x4 - core index']
  #allocation1 [shape = 'u32[144,128]{1,0:T(1,128)}', space=vmem, size = 0x12000, scoped, tag = 'internal scratch']
  %s0 = inlined_call_operand.hbm [shape: f32[16,32], index: 0, kind: input, shape index: {}]
  %s1 = inlined_call_operand.hbm [shape: f32[32,32], index: 1, kind: input, shape index: {}]
  %s2 = inlined_call_operand.vmem [shape: f32[1,32], index: 2, kind: input, shape index: {}]
  %s3 = inlined_call_operand.hbm [shape: f32[16,32], index: 3, kind: output, shape index: {}]
  %s4 = sld [smem:[#allocation0]]
  $region30: #{tpu_custom_call.1} parent=0
    _
  %s6 = ssub.s32 1, %s4
  %s7 = scalar_select 0, %s6, %s4
  $region1: #{tpu_custom_call.1} parent=0
    #allocation2 [shape = 'u8[8192]{0}', space=vmem, size = 0x2000, scoped, tag = 'input window, operand 0, single buffered']
    #allocation3 [shape = 's32[1]{0}', space=sflag, size = 0x4, scoped, tag = 'scoped memory for tpu_custom_call.1']
    #allocation4 [shape = 's32[1]{0}', space=sflag, size = 0x4, scoped, tag = 'scoped memory for tpu_custom_call.1']
    #allocation5 [shape = 'u8[16384]{0}', space=vmem, size = 0x4000, scoped, tag = 'input window, operand 1, single buffered']
    #allocation6 [shape = 's32[1]{0}', space=sflag, size = 0x4, scoped, tag = 'scoped memory for tpu_custom_call.1']
    #allocation7 [shape = 'u8[8192]{0}', space=vmem, size = 0x2000, scoped, tag = 'output window, operand 0, single buffered']
    %8 = vsyncpa [#allocation3], 0
    %9 = vsyncpa [#allocation6], 0
    %10 = vsyncpa [#allocation4], 0
    // Predicated region
    $region2: #{tpu_custom_call.1} parent=1 // pred_check
      _
    $region3: #{tpu_custom_call.1} parent=1 // pred_check_branch
      %12 = sbr.rel (0) target = $region5
    $region4: #{tpu_custom_call.1} parent=1 // pred_region
      %s14 = ssub.s32 256, 256
      %15 = vsyncadd [#allocation3], %s14
      %s16 = sshll.u32 [#allocation2], 4
      %s17 = int_to_ptr.vmem [resolvable:$true] %s16
      %22 = dma.hbm_to_vmem [thread:$0]  %s0, 256, %s17, [#allocation3], 128, 128, 8
    $region5: #{tpu_custom_call.1} parent=1 // pred_fallthru
      _
    // Predicated region
    $region6: #{tpu_custom_call.1} parent=1 // pred_check
      _
    $region7: #{tpu_custom_call.1} parent=1 // pred_check_branch
      %24 = sbr.rel (0) target = $region9
    $region8: #{tpu_custom_call.1} parent=1 // pred_region
      %s26 = ssub.s32 512, 512
      %27 = vsyncadd [#allocation6], %s26
      %s28 = sshll.u32 [#allocation5], 4
      %s29 = int_to_ptr.vmem [resolvable:$true] %s28
      %34 = dma.hbm_to_vmem [thread:$0]  %s1, 512, %s29, [#allocation6], 128, 128, 8
    $region9: #{tpu_custom_call.1} parent=1 // pred_fallthru
      _
    // Predicated region
    $region10: #{tpu_custom_call.1} parent=1 // pred_check
      _
    $region11: #{tpu_custom_call.1} parent=1 // pred_check_branch
      %36 = sbr.rel (0) target = $region13
    $region12: #{tpu_custom_call.1} parent=1 // pred_region
      _
    $region13: #{tpu_custom_call.1} parent=1 // pred_fallthru
      _
    // Predicated region
    $region14: #{tpu_custom_call.1} parent=1 // pred_check
      _
    $region15: #{tpu_custom_call.1} parent=1 // pred_check_branch
      %38 = sbr.rel (0) target = $region17
    $region16: #{tpu_custom_call.1} parent=1 // pred_region
      %39 = dma.done [#allocation3], 256
    $region17: #{tpu_custom_call.1} parent=1 // pred_fallthru
      _
    // Predicated region
    $region18: #{tpu_custom_call.1} parent=1 // pred_check
      _
    $region19: #{tpu_custom_call.1} parent=1 // pred_check_branch
      %41 = sbr.rel (0) target = $region21
    $region20: #{tpu_custom_call.1} parent=1 // pred_region
      %42 = dma.done [#allocation6], 512
    $region21: #{tpu_custom_call.1} parent=1 // pred_fallthru
      _
    %v43 = vld [vmem:[#allocation2] sm:$0xff]
    %v44 = vld [vmem:[#allocation2 + $0x8] sm:$0xff]
    %v45 = vld [vmem:[#allocation5] sm:$0xff]
    %v46 = vld [vmem:[#allocation5 + $0x8] sm:$0xff]
    %v47 = vld [vmem:[#allocation5 + $0x10] sm:$0xff]
    %v48 = vld [vmem:[#allocation5 + $0x18] sm:$0xff]
    %v49 = vld [vmem:[%s2] sm:$0x1]
    %v51 = vlaneseq
    %v52 = vshrl.u32 %v51, 7
    %v53 = vsub.s32 0, %v52
    %v54 = vrot.slane %v49, %v53
    %vm56 = vcmask 261120
    %v58 = vsel %vm56, %v43, 0
    %v61 = vsel %vm56, %v44, 0
    %63 = vmatprep.subr.mxu0 0.0
    %64 = vmatpush1.msra.mxu0 %v45
    %65 = vmatprep.subr.mxu0 0.0
    %66 = vmatpush1.msra.mxu0 %v46
    %67 = vmatprep.subr.mxu0 0.0
    %68 = vmatpush1.msra.mxu0 %v47
    %69 = vmatprep.subr.mxu0 0.0
    %70 = vmatpush1.msra.mxu0 %v48
    %71 = vmatprep.subr.mxu0 0.0
    %72 = vmatpush1.msra.mxu0 0.0
    %73 = vmatprep.subr.mxu0 0.0
    %74 = vmatpush1.msra.mxu0 0.0
    %75 = vmatprep.subr.mxu0 0.0
    %76 = vmatpush1.msra.mxu0 0.0
    %77 = vmatprep.subr.mxu0 0.0
    %78 = vmatpush1.msra.mxu0 0.0
    %79 = vmatprep.subr.mxu0 0.0
    %80 = vmatpush1.msra.mxu0 0.0
    %81 = vmatprep.subr.mxu0 0.0
    %82 = vmatpush1.msra.mxu0 0.0
    %83 = vmatprep.subr.mxu0 0.0
    %84 = vmatpush1.msra.mxu0 0.0
    %85 = vmatprep.subr.mxu0 0.0
    %86 = vmatpush1.msra.mxu0 0.0
    %87 = vmatprep.subr.mxu0 0.0
    %88 = vmatpush1.msra.mxu0 0.0
    %89 = vmatprep.subr.mxu0 0.0
    %90 = vmatpush1.msra.mxu0 0.0
    %91 = vmatprep.subr.mxu0 0.0
    %92 = vmatpush1.msra.mxu0 0.0
    %93 = vmatprep.subr.mxu0 0.0
    %94 = vmatpush1.msra.mxu0 0.0
    %95 = vmatprep.subr.mxu0 0.0
    %96 = vmatpush1.msra.mxu0 0.0
    %97 = vmatprep.subr.mxu0 0.0
    %98 = vmatpush1.msra.mxu0 0.0
    %99 = vmatprep.subr.mxu0 0.0
    %100 = vmatpush1.msra.mxu0 0.0
    %101 = vmatprep.subr.mxu0 0.0
    %102 = vmatpush1.msra.mxu0 0.0
    %103 = vmatprep.subr.mxu0 0.0
    %104 = vmatpush1.msra.mxu0 0.0
    %105 = vmatprep.subr.mxu0 0.0
    %106 = vmatpush1.msra.mxu0 0.0
    %107 = vmatprep.subr.mxu0 0.0
    %108 = vmatpush1.msra.mxu0 0.0
    %109 = vmatprep.subr.mxu0 0.0
    %110 = vmatpush1.msra.mxu0 0.0
    %111 = vmatprep.subr.mxu0 0.0
    %112 = vmatpush1.msra.mxu0 0.0
    %113 = vmatprep.subr.mxu0 0.0
    %114 = vmatpush1.msra.mxu0 0.0
    %115 = vmatprep.subr.mxu0 0.0
    %116 = vmatpush1.msra.mxu0 0.0
    %117 = vmatprep.subr.mxu0 0.0
    %118 = vmatpush1.msra.mxu0 0.0
    %119 = vmatprep.subr.mxu0 0.0
    %120 = vmatpush1.msra.mxu0 0.0
    %121 = vmatprep.subr.mxu0 0.0
    %122 = vmatpush1.msra.mxu0 0.0
    %123 = vmatprep.subr.mxu0 0.0
    %124 = vmatpush1.msra.mxu0 0.0
    %125 = vmatprep.subr.mxu0 0.0
    %126 = vmatpush1.msra.mxu0 0.0
    %127 = vmatprep.mubr.f32.mxu0 0.0
    %128 = vmatmul.mubr.f32.gmra.mrb[0].mxu0 %v58
    %v129 = vpop.f32.mrb[0].mxu0
    %v130 = vadd.f32 %v54, %v129
    %v131 = vpop.f32.mrb[0].mxu0
    %132 = vmatprep.mubr.f32.mxu0 0.0
    %133 = vmatmul.mubr.f32.gmra.mrb[0].mxu0 %v61
    %v134 = vpop.f32.mrb[0].mxu0
    %v135 = vadd.f32 %v54, %v134
    %v136 = vpop.f32.mrb[0].mxu0
    %137 = vdwg.mxu0
    %138 = vst.msk [vmem:[#allocation7] sm:$0xff] %vm56, %v130
    %139 = vst.msk [vmem:[#allocation7 + $0x8] sm:$0xff] %vm56, %v135
    // Predicated region
    $region22: #{tpu_custom_call.1} parent=1 // pred_check
      _
    $region23: #{tpu_custom_call.1} parent=1 // pred_check_branch
      %141 = sbr.rel (0) target = $region25
    $region24: #{tpu_custom_call.1} parent=1 // pred_region
      %s143 = ssub.s32 256, 256
      %144 = vsyncadd [#allocation4], %s143
      %s145 = sshll.u32 [#allocation7], 4
      %s146 = int_to_ptr.vmem [resolvable:$true] %s145
      %151 = dma.vmem_to_hbm [thread:$0]  %s146, 256, %s3, [#allocation4], 128, 128, 8
    $region25: #{tpu_custom_call.1} parent=1 // pred_fallthru
      _
    // Predicated region
    $region26: #{tpu_custom_call.1} parent=1 // pred_check
      _
    $region27: #{tpu_custom_call.1} parent=1 // pred_check_branch
      %153 = sbr.rel (0) target = $region29
    $region28: #{tpu_custom_call.1} parent=1 // pred_region
      %154 = dma.done [#allocation4], 256
    $region29: #{tpu_custom_call.1} parent=1 // pred_fallthru
      _
    %155 = vsyncpa [#allocation3], 1
    %156 = vsyncpa [#allocation6], 1
    %157 = vsyncpa [#allocation4], 1

</llo_original>
